<compile_context>
chip_gen: v7x
topology: tpu7x:2x2x1
jax: 0.10.0
libtpu: 0.0.40
codegen_flags: <defaults>
</compile_context>

<pallas_src>
import functools

import jax
import jax.numpy as jnp
import numpy as np
from jax import lax
from jax.experimental import pallas as pl
from jax.experimental.pallas import tpu as pltpu


def _round_up(x, m):
    return (x + m - 1) // m * m


def _hungarian_sums_kernel(logits_ref, mrows_ref, tlab_ref, tbox_ref, w_ref,
                           out_ref, *, n_rows):
    """Per-tile partial sums.

    Output row (lane-dense, 128 lanes):
      lane 0: sum over valid rows in this tile of logsumexp(logits)
      lane 1: sum over valid rows in this tile of logits[:, no_object]
      lanes 2..7 (tile 0 only):
        2: sum_m w[t_m] * (lse_m - logit_{t_m})      (matched weighted NLL)
        3: sum_m w[t_m]
        4: sum_m lse_m
        5: sum_m logit_{no_object, m}
        6: L1 box loss sum
        7: sum_m (1 - giou_m)
    """
    i = pl.program_id(0)
    tile_n, c1 = logits_ref.shape

    # ---- full-logits partial sums (every tile), rows beyond n_rows masked ----
    x = logits_ref[...].astype(jnp.float32)                       # [T, C1]
    row = i * tile_n + lax.broadcasted_iota(jnp.int32, (tile_n, 1), 0)
    valid = row < n_rows
    validf = valid.astype(jnp.float32)
    x = jnp.where(valid, x, 0.0)                                  # kill padding garbage

    m = jnp.max(x, axis=-1, keepdims=True)
    lse = m + jnp.log(jnp.sum(jnp.exp(x - m), axis=-1, keepdims=True))   # [T,1]
    s_lse_all = jnp.sum(lse * validf)
    s_noobj_all = jnp.sum(x[:, c1 - 1:c1] * validf)

    lane = lax.broadcasted_iota(jnp.int32, (1, 128), 1)
    base = (jnp.where(lane == 0, s_lse_all, 0.0)
            + jnp.where(lane == 1, s_noobj_all, 0.0))

    @pl.when(i > 0)
    def _():
        out_ref[...] = base

    # ---- matched-row correction + box losses: tiny, done once on tile 0 ----
    @pl.when(i == 0)
    def _():
        mrows = mrows_ref[...].astype(jnp.float32)                # [Nm, C1+4]
        mlog = mrows[:, :c1]                                      # matched logits
        obox = mrows[:, c1:c1 + 4]                                # matched pred boxes
        tlab = tlab_ref[...]                                      # [Nm, 1] int32
        tbox = tbox_ref[...].astype(jnp.float32)                  # [Nm, 4]
        w = w_ref[...].astype(jnp.float32)                        # [1, C1]

        mm = jnp.max(mlog, axis=-1, keepdims=True)
        mlse = mm + jnp.log(jnp.sum(jnp.exp(mlog - mm), axis=-1, keepdims=True))
        cls_iota = lax.broadcasted_iota(jnp.int32, mlog.shape, 1)
        onehot = (cls_iota == tlab).astype(jnp.float32)
        logit_t = jnp.sum(mlog * onehot, axis=-1, keepdims=True)
        w_t = jnp.sum(w * onehot, axis=-1, keepdims=True)

        s_m_wnll = jnp.sum(w_t * (mlse - logit_t))
        s_m_w = jnp.sum(w_t)
        s_m_lse = jnp.sum(mlse)
        s_m_noobj = jnp.sum(mlog[:, c1 - 1:c1])

        # L1 bbox loss
        l1_sum = jnp.sum(jnp.abs(obox - tbox))

        # GIoU (diagonal) on cxcywh -> xyxy boxes
        ocx, ocy, ow, oh = obox[:, 0:1], obox[:, 1:2], obox[:, 2:3], obox[:, 3:4]
        tcx, tcy, tw, th = tbox[:, 0:1], tbox[:, 1:2], tbox[:, 2:3], tbox[:, 3:4]
        ox0, oy0, ox1, oy1 = ocx - 0.5 * ow, ocy - 0.5 * oh, ocx + 0.5 * ow, ocy + 0.5 * oh
        tx0, ty0, tx1, ty1 = tcx - 0.5 * tw, tcy - 0.5 * th, tcx + 0.5 * tw, tcy + 0.5 * th
        area_o = (ox1 - ox0) * (oy1 - oy0)
        area_t = (tx1 - tx0) * (ty1 - ty0)
        iw = jnp.maximum(jnp.minimum(ox1, tx1) - jnp.maximum(ox0, tx0), 0.0)
        ih = jnp.maximum(jnp.minimum(oy1, ty1) - jnp.maximum(oy0, ty0), 0.0)
        inter = iw * ih
        union = area_o + area_t - inter
        iou = inter * pl.reciprocal(union, approx=True)           # EUP slot
        cw = jnp.maximum(ox1, tx1) - jnp.minimum(ox0, tx0)
        ch = jnp.maximum(oy1, ty1) - jnp.minimum(oy0, ty0)
        area_c = jnp.maximum(cw, 0.0) * jnp.maximum(ch, 0.0)
        giou = iou - (area_c - union) * pl.reciprocal(area_c, approx=True)
        giou_sum = jnp.sum(1.0 - giou)

        extra = (jnp.where(lane == 2, s_m_wnll, 0.0)
                 + jnp.where(lane == 3, s_m_w, 0.0)
                 + jnp.where(lane == 4, s_m_lse, 0.0)
                 + jnp.where(lane == 5, s_m_noobj, 0.0)
                 + jnp.where(lane == 6, l1_sum, 0.0)
                 + jnp.where(lane == 7, giou_sum, 0.0))
        out_ref[...] = base + extra


def hungarian_partial_sums(logits2d, matched_rows, tlab, tbox, weight2d):
    """Row-tiled Pallas call returning (num_tiles, 128) lane-dense partial sums."""
    n_rows, c1 = logits2d.shape
    nm = matched_rows.shape[0]
    tile_n = min(1024, _round_up(n_rows, 8))      # multiple of 8 sublanes, <=~0.5MB/buf
    grid_n = pl.cdiv(n_rows, tile_n)
    kernel = functools.partial(_hungarian_sums_kernel, n_rows=n_rows)
    return pl.pallas_call(
        kernel,
        out_shape=jax.ShapeDtypeStruct((grid_n, 128), jnp.float32),
        grid=(grid_n,),
        in_specs=[
            pl.BlockSpec((tile_n, c1), lambda i: (i, 0)),       # logits (model dtype)
            pl.BlockSpec((nm, c1 + 4), lambda i: (0, 0)),       # matched output rows
            pl.BlockSpec((nm, 1), lambda i: (0, 0)),            # matched target labels
            pl.BlockSpec((nm, 4), lambda i: (0, 0)),            # matched target boxes
            pl.BlockSpec((1, c1), lambda i: (0, 0)),            # empty_weight
        ],
        out_specs=pl.BlockSpec((1, 128), lambda i: (i, 0)),
        compiler_params=pltpu.CompilerParams(
            dimension_semantics=("parallel",)),                 # megacore on v7x
    )(logits2d, matched_rows, tlab, tbox, weight2d)


def identity_matcher(outputs, targets):
    """Deterministic stand-in for the Hungarian matcher: query i <-> target i."""
    indices = []
    for target in targets:
        t = target["labels"].shape[0]
        idx = jnp.arange(t, dtype=jnp.int32)
        indices.append((idx, idx))
    return indices


class HungarianLossJAX:
    def __init__(self, num_classes, matcher, eos_coef, reduction="sum"):
        self.num_classes = num_classes
        self.matcher = matcher
        self.eos_coef = eos_coef
        self.reduction = reduction
        # empty_weight buffer: ones, last (no-object) class gets eos_coef
        self.empty_weight = jnp.ones((num_classes + 1,), jnp.float32).at[-1].set(eos_coef)

    def __call__(self, outputs, targets):
        c1 = self.num_classes + 1
        B, Q, _ = outputs.shape
        labels = outputs[..., :c1]           # [B, Q, C+1]
        bboxes = outputs[..., c1:]           # [B, Q, 4]

        indices = self.matcher({"labels": labels, "bboxes": bboxes}, targets)
        # DETR clamps the box normalizer to >= 1 (avoids div-by-zero on empty batch).
        num_bboxes = max(int(sum(int(t["labels"].shape[0]) for t in targets)), 1)

        batch_idx = jnp.concatenate(
            [jnp.full_like(i, b) for b, (i, _) in enumerate(indices)])
        out_idx = jnp.concatenate([i for i, _ in indices])

        # Single tiny gather: matched output rows carry both logits and pred boxes.
        matched_rows = outputs[batch_idx, out_idx]                           # [Nm, C1+4]
        tlab = jnp.concatenate(
            [t["labels"][j] for t, (_, j) in zip(targets, indices)]
        ).astype(jnp.int32)[:, None]                                          # [Nm, 1]
        tbox = jnp.concatenate(
            [t["bboxes"][j] for t, (_, j) in zip(targets, indices)], axis=0
        ).astype(jnp.float32)                                                 # [Nm, 4]

        logits2d = labels.reshape(B * Q, c1)        # keep model dtype (no f32 upcast)
        weight2d = self.empty_weight.reshape(1, c1)

        sums = hungarian_partial_sums(logits2d, matched_rows, tlab, tbox, weight2d)
        col = jnp.sum(sums, axis=0)                 # [128] combine per-tile partials

        n = B * Q
        nm = int(tlab.shape[0])
        eos = self.eos_coef
        # weighted CE: unmatched queries all use the no-object class (weight eos_coef)
        ce_num = eos * (col[0] - col[1]) - eos * (col[4] - col[5]) + col[2]
        ce_den = eos * (n - nm) + col[3]
        loss_labels = ce_num / ce_den
        inv_nb = 1.0 / float(num_bboxes)
        loss_bboxes = col[6] * inv_nb
        loss_giou = col[7] * inv_nb

        if self.reduction == "sum":
            return loss_labels + loss_bboxes + loss_giou
        return {"loss_labels": loss_labels, "loss_bboxes": loss_bboxes,
                "loss_giou": loss_giou}


def _reference_loss(logits2d, tcls2d, weight2d, obox, tbox, num_bboxes):
    """Plain-JAX reference mirroring the PyTorch semantics."""
    logp = jax.nn.log_softmax(logits2d, axis=-1)
    tcls = tcls2d[:, 0]
    nll = -jnp.take_along_axis(logp, tcls[:, None], axis=-1)[:, 0]
    w = weight2d[0][tcls]
    loss_labels = jnp.sum(w * nll) / jnp.sum(w)

    loss_bboxes = jnp.sum(jnp.abs(obox - tbox)) / num_bboxes

    def to_xyxy(b):
        cx, cy, bw, bh = b[:, 0], b[:, 1], b[:, 2], b[:, 3]
        return jnp.stack([cx - 0.5 * bw, cy - 0.5 * bh, cx + 0.5 * bw, cy + 0.5 * bh], -1)

    o, t = to_xyxy(obox), to_xyxy(tbox)
    area_o = (o[:, 2] - o[:, 0]) * (o[:, 3] - o[:, 1])
    area_t = (t[:, 2] - t[:, 0]) * (t[:, 3] - t[:, 1])
    iw = jnp.clip(jnp.minimum(o[:, 2], t[:, 2]) - jnp.maximum(o[:, 0], t[:, 0]), 0)
    ih = jnp.clip(jnp.minimum(o[:, 3], t[:, 3]) - jnp.maximum(o[:, 1], t[:, 1]), 0)
    inter = iw * ih
    union = area_o + area_t - inter
    iou = inter / union
    cw = jnp.maximum(o[:, 2], t[:, 2]) - jnp.minimum(o[:, 0], t[:, 0])
    ch = jnp.maximum(o[:, 3], t[:, 3]) - jnp.minimum(o[:, 1], t[:, 1])
    area_c = jnp.clip(cw, 0) * jnp.clip(ch, 0)
    giou = iou - (area_c - union) / area_c
    loss_giou = jnp.sum(1.0 - giou) / num_bboxes
    return loss_labels + loss_bboxes + loss_giou


if __name__ == "__main__":
    key = jax.random.PRNGKey(0)
    num_classes = 4          # -> 5 logits incl. no-object class
    eos_coef = 0.1
    B, Q, T = 2, 8, 6        # batch, queries, targets per image

    k1, k2, k3, k4, k5 = jax.random.split(key, 5)
    # raw model outputs: [B, Q, (num_classes+1) + 4]
    outputs = jax.random.normal(k1, (B, Q, num_classes + 1 + 4), jnp.float32)
    # make the box part look like valid cxcywh boxes in (0,1)
    box_cxcy = jax.random.uniform(k2, (B, Q, 2), minval=0.25, maxval=0.75)
    box_wh = jax.random.uniform(k3, (B, Q, 2), minval=0.05, maxval=0.3)
    outputs = outputs.at[..., num_classes + 1:].set(
        jnp.concatenate([box_cxcy, box_wh], axis=-1))

    targets = []
    for b in range(B):
        kk1, kk2, kk3, k4 = jax.random.split(k4, 4)
        labels = jax.random.randint(kk1, (T,), 0, num_classes, dtype=jnp.int32)
        t_cxcy = jax.random.uniform(kk2, (T, 2), minval=0.25, maxval=0.75)
        t_wh = jax.random.uniform(kk3, (T, 2), minval=0.05, maxval=0.3)
        targets.append({"labels": labels,
                        "bboxes": jnp.concatenate([t_cxcy, t_wh], axis=-1)})

    loss_mod = HungarianLossJAX(num_classes, identity_matcher, eos_coef, reduction="sum")
    loss = loss_mod(outputs, targets)
    loss = jax.block_until_ready(loss)

    # sanity check against a plain-JAX reference of the same math
    c1 = num_classes + 1
    labels3d = outputs[..., :c1]
    bboxes3d = outputs[..., c1:]
    batch_idx = jnp.concatenate([jnp.full((T,), b, jnp.int32) for b in range(B)])
    out_idx = jnp.concatenate([jnp.arange(T, dtype=jnp.int32) for _ in range(B)])
    tcls = jnp.full((B, Q), num_classes, jnp.int32).at[batch_idx, out_idx].set(
        jnp.concatenate([t["labels"] for t in targets]))
    ref = _reference_loss(labels3d.reshape(B * Q, c1),
                          tcls.reshape(B * Q, 1),
                          loss_mod.empty_weight.reshape(1, c1),
                          bboxes3d[batch_idx, out_idx],
                          jnp.concatenate([t["bboxes"] for t in targets], 0),
                          B * T)
    # tolerance accounts for the approximate (EUP) reciprocals in the GIoU term
    np.testing.assert_allclose(np.asarray(loss), np.asarray(ref), rtol=2e-3, atol=1e-3)

    print("KERNEL_OK")
</pallas_src>

<mosaic_0001>
module attributes {stable_mosaic.version = 11 : i64} {
  func.func @_hungarian_sums_kernel(%arg0: i32, %arg1: memref<16x5xf32, #tpu.memory_space<vmem>>, %arg2: memref<12x9xf32, #tpu.memory_space<vmem>>, %arg3: memref<12x1xi32, #tpu.memory_space<vmem>>, %arg4: memref<12x4xf32, #tpu.memory_space<vmem>>, %arg5: memref<1x5xf32, #tpu.memory_space<vmem>>, %arg6: memref<1x128xf32, #tpu.memory_space<vmem>>) attributes {dimension_semantics = [#tpu.dimension_semantics<parallel>], iteration_bounds = array<i64: 1>, scalar_prefetch = 0 : i64, scratch_operands = 0 : i64, tpu.core_type = #tpu.core_type<tc>, window_params = [{transform_indices = @transform_0, window_bounds = array<i64: 16, 5>}, {pipeline_mode = #tpu.pipeline_mode<synchronous>, transform_indices = @transform_1, window_bounds = array<i64: 12, 9>}, {pipeline_mode = #tpu.pipeline_mode<synchronous>, transform_indices = @transform_2, window_bounds = array<i64: 12, 1>}, {pipeline_mode = #tpu.pipeline_mode<synchronous>, transform_indices = @transform_3, window_bounds = array<i64: 12, 4>}, {pipeline_mode = #tpu.pipeline_mode<synchronous>, transform_indices = @transform_4, window_bounds = array<i64: 1, 5>}, {transform_indices = @transform_5, window_bounds = array<i64: 1, 128>}]} {
    %c0 = arith.constant 0 : index
    %c0_0 = arith.constant 0 : index
    %0 = vector.load %arg1[%c0, %c0_0] : memref<16x5xf32, #tpu.memory_space<vmem>>, vector<16x5xf32>
    %c16_i32 = arith.constant 16 : i32
    %1 = arith.muli %arg0, %c16_i32 : i32
    %2 = tpu.iota {dimensions = array<i32: 0>} : vector<16x1xi32>
    %3 = vector.broadcast %1 : i32 to vector<16x1xi32>
    %4 = arith.addi %3, %2 : vector<16x1xi32>
    %c16_i32_1 = arith.constant 16 : i32
    %5 = vector.broadcast %c16_i32_1 : i32 to vector<16x1xi32>
    %6 = arith.cmpi slt, %4, %5 : vector<16x1xi32>
    %7 = arith.extui %6 : vector<16x1xi1> to vector<16x1xi32>
    %8 = arith.sitofp %7 : vector<16x1xi32> to vector<16x1xf32>
    %cst = arith.constant 0.000000e+00 : f32
    %9 = vector.shape_cast %6 : vector<16x1xi1> to vector<16x1xi1>
    %10 = vector.broadcast %9 : vector<16x1xi1> to vector<16x5xi1>
    %11 = vector.broadcast %cst : f32 to vector<16x5xf32>
    %12 = arith.select %10, %0, %11 : vector<16x5xi1>, vector<16x5xf32>
    %cst_2 = arith.constant dense<0xFF800000> : vector<16xf32>
    %13 = vector.multi_reduction <maximumf>, %12, %cst_2 [1] : vector<16x5xf32> to vector<16xf32>
    %14 = vector.shape_cast %13 : vector<16xf32> to vector<16x1xf32>
    %15 = vector.broadcast %14 : vector<16x1xf32> to vector<16x5xf32>
    %16 = arith.subf %12, %15 : vector<16x5xf32>
    %17 = math.exp %16 : vector<16x5xf32>
    %cst_3 = arith.constant dense<0.000000e+00> : vector<16xf32>
    %18 = vector.multi_reduction <add>, %17, %cst_3 [1] : vector<16x5xf32> to vector<16xf32>
    %19 = vector.shape_cast %18 : vector<16xf32> to vector<16x1xf32>
    %20 = math.log %19 : vector<16x1xf32>
    %21 = arith.addf %14, %20 : vector<16x1xf32>
    %22 = arith.mulf %21, %8 : vector<16x1xf32>
    %23 = vector.shape_cast %22 : vector<16x1xf32> to vector<1x16x1xf32>
    %cst_4 = arith.constant dense<0.000000e+00> : vector<1xf32>
    %24 = vector.multi_reduction <add>, %23, %cst_4 [1, 2] : vector<1x16x1xf32> to vector<1xf32>
    %25 = vector.shape_cast %24 : vector<1xf32> to vector<1x1x1xf32>
    %26 = vector.extract %25[0, 0, 0] : f32 from vector<1x1x1xf32>
    %27 = vector.extract_strided_slice %12 {offsets = [0, 4], sizes = [16, 1], strides = [1, 1]} : vector<16x5xf32> to vector<16x1xf32>
    %28 = arith.mulf %27, %8 : vector<16x1xf32>
    %29 = vector.shape_cast %28 : vector<16x1xf32> to vector<1x16x1xf32>
    %cst_5 = arith.constant dense<0.000000e+00> : vector<1xf32>
    %30 = vector.multi_reduction <add>, %29, %cst_5 [1, 2] : vector<1x16x1xf32> to vector<1xf32>
    %31 = vector.shape_cast %30 : vector<1xf32> to vector<1x1x1xf32>
    %32 = vector.extract %31[0, 0, 0] : f32 from vector<1x1x1xf32>
    %33 = tpu.iota {dimensions = array<i32: 1>} : vector<1x128xi32>
    %c0_i32 = arith.constant 0 : i32
    %34 = vector.broadcast %c0_i32 : i32 to vector<1x128xi32>
    %35 = arith.cmpi eq, %33, %34 : vector<1x128xi32>
    %cst_6 = arith.constant 0.000000e+00 : f32
    %36 = vector.broadcast %26 : f32 to vector<1x128xf32>
    %37 = vector.broadcast %cst_6 : f32 to vector<1x128xf32>
    %38 = arith.select %35, %36, %37 : vector<1x128xi1>, vector<1x128xf32>
    %c1_i32 = arith.constant 1 : i32
    %39 = vector.broadcast %c1_i32 : i32 to vector<1x128xi32>
    %40 = arith.cmpi eq, %33, %39 : vector<1x128xi32>
    %cst_7 = arith.constant 0.000000e+00 : f32
    %41 = vector.broadcast %32 : f32 to vector<1x128xf32>
    %42 = vector.broadcast %cst_7 : f32 to vector<1x128xf32>
    %43 = arith.select %40, %41, %42 : vector<1x128xi1>, vector<1x128xf32>
    %44 = arith.addf %38, %43 : vector<1x128xf32>
    %c0_i32_8 = arith.constant 0 : i32
    %45 = arith.cmpi sgt, %arg0, %c0_i32_8 : i32
    %46 = arith.extui %45 : i1 to i32
    %c0_i32_9 = arith.constant 0 : i32
    %47 = arith.cmpi ne, %46, %c0_i32_9 : i32
    scf.if %47 {
      %c0_12 = arith.constant 0 : index
      %c0_13 = arith.constant 0 : index
      %51 = vector.load %arg6[%c0_12, %c0_13] : memref<1x128xf32, #tpu.memory_space<vmem>>, vector<1x128xf32>
      tpu.vector_store %arg6[%c0_12, %c0_13], %44 {strides = array<i32>} : memref<1x128xf32, #tpu.memory_space<vmem>>, vector<1x128xf32>,
    } else {
    }
    %c0_i32_10 = arith.constant 0 : i32
    %48 = arith.cmpi eq, %arg0, %c0_i32_10 : i32
    %49 = arith.extui %48 : i1 to i32
    %c0_i32_11 = arith.constant 0 : i32
    %50 = arith.cmpi ne, %49, %c0_i32_11 : i32
    scf.if %50 {
      %c0_12 = arith.constant 0 : index
      %c0_13 = arith.constant 0 : index
      %51 = vector.load %arg2[%c0_12, %c0_13] : memref<12x9xf32, #tpu.memory_space<vmem>>, vector<12x9xf32>
      %52 = vector.extract_strided_slice %51 {offsets = [0, 0], sizes = [12, 5], strides = [1, 1]} : vector<12x9xf32> to vector<12x5xf32>
      %53 = vector.extract_strided_slice %51 {offsets = [0, 5], sizes = [12, 4], strides = [1, 1]} : vector<12x9xf32> to vector<12x4xf32>
      %c0_14 = arith.constant 0 : index
      %c0_15 = arith.constant 0 : index
      %54 = vector.load %arg3[%c0_14, %c0_15] : memref<12x1xi32, #tpu.memory_space<vmem>>, vector<12x1xi32>
      %c0_16 = arith.constant 0 : index
      %c0_17 = arith.constant 0 : index
      %55 = vector.load %arg4[%c0_16, %c0_17] : memref<12x4xf32, #tpu.memory_space<vmem>>, vector<12x4xf32>
      %c0_18 = arith.constant 0 : index
      %c0_19 = arith.constant 0 : index
      %56 = vector.load %arg5[%c0_18, %c0_19] : memref<1x5xf32, #tpu.memory_space<vmem>>, vector<1x5xf32>
      %cst_20 = arith.constant dense<0xFF800000> : vector<12xf32>
      %57 = vector.multi_reduction <maximumf>, %52, %cst_20 [1] : vector<12x5xf32> to vector<12xf32>
      %58 = vector.shape_cast %57 : vector<12xf32> to vector<12x1xf32>
      %59 = vector.broadcast %58 : vector<12x1xf32> to vector<12x5xf32>
      %60 = arith.subf %52, %59 : vector<12x5xf32>
      %61 = math.exp %60 : vector<12x5xf32>
      %cst_21 = arith.constant dense<0.000000e+00> : vector<12xf32>
      %62 = vector.multi_reduction <add>, %61, %cst_21 [1] : vector<12x5xf32> to vector<12xf32>
      %63 = vector.shape_cast %62 : vector<12xf32> to vector<12x1xf32>
      %64 = math.log %63 : vector<12x1xf32>
      %65 = arith.addf %58, %64 : vector<12x1xf32>
      %66 = tpu.iota {dimensions = array<i32: 1>} : vector<12x5xi32>
      %67 = vector.broadcast %54 : vector<12x1xi32> to vector<12x5xi32>
      %68 = arith.cmpi eq, %66, %67 : vector<12x5xi32>
      %69 = arith.extui %68 : vector<12x5xi1> to vector<12x5xi32>
      %70 = arith.sitofp %69 : vector<12x5xi32> to vector<12x5xf32>
      %71 = arith.mulf %52, %70 : vector<12x5xf32>
      %cst_22 = arith.constant dense<0.000000e+00> : vector<12xf32>
      %72 = vector.multi_reduction <add>, %71, %cst_22 [1] : vector<12x5xf32> to vector<12xf32>
      %73 = vector.shape_cast %72 : vector<12xf32> to vector<12x1xf32>
      %74 = vector.broadcast %56 : vector<1x5xf32> to vector<12x5xf32>
      %75 = arith.mulf %74, %70 : vector<12x5xf32>
      %cst_23 = arith.constant dense<0.000000e+00> : vector<12xf32>
      %76 = vector.multi_reduction <add>, %75, %cst_23 [1] : vector<12x5xf32> to vector<12xf32>
      %77 = vector.shape_cast %76 : vector<12xf32> to vector<12x1xf32>
      %78 = arith.subf %65, %73 : vector<12x1xf32>
      %79 = arith.mulf %77, %78 : vector<12x1xf32>
      %80 = vector.shape_cast %79 : vector<12x1xf32> to vector<1x12x1xf32>
      %cst_24 = arith.constant dense<0.000000e+00> : vector<1xf32>
      %81 = vector.multi_reduction <add>, %80, %cst_24 [1, 2] : vector<1x12x1xf32> to vector<1xf32>
      %82 = vector.shape_cast %81 : vector<1xf32> to vector<1x1x1xf32>
      %83 = vector.extract %82[0, 0, 0] : f32 from vector<1x1x1xf32>
      %84 = vector.shape_cast %77 : vector<12x1xf32> to vector<1x12x1xf32>
      %cst_25 = arith.constant dense<0.000000e+00> : vector<1xf32>
      %85 = vector.multi_reduction <add>, %84, %cst_25 [1, 2] : vector<1x12x1xf32> to vector<1xf32>
      %86 = vector.shape_cast %85 : vector<1xf32> to vector<1x1x1xf32>
      %87 = vector.extract %86[0, 0, 0] : f32 from vector<1x1x1xf32>
      %88 = vector.shape_cast %65 : vector<12x1xf32> to vector<1x12x1xf32>
      %cst_26 = arith.constant dense<0.000000e+00> : vector<1xf32>
      %89 = vector.multi_reduction <add>, %88, %cst_26 [1, 2] : vector<1x12x1xf32> to vector<1xf32>
      %90 = vector.shape_cast %89 : vector<1xf32> to vector<1x1x1xf32>
      %91 = vector.extract %90[0, 0, 0] : f32 from vector<1x1x1xf32>
      %92 = vector.extract_strided_slice %52 {offsets = [0, 4], sizes = [12, 1], strides = [1, 1]} : vector<12x5xf32> to vector<12x1xf32>
      %93 = vector.shape_cast %92 : vector<12x1xf32> to vector<1x12x1xf32>
      %cst_27 = arith.constant dense<0.000000e+00> : vector<1xf32>
      %94 = vector.multi_reduction <add>, %93, %cst_27 [1, 2] : vector<1x12x1xf32> to vector<1xf32>
      %95 = vector.shape_cast %94 : vector<1xf32> to vector<1x1x1xf32>
      %96 = vector.extract %95[0, 0, 0] : f32 from vector<1x1x1xf32>
      %97 = arith.subf %53, %55 : vector<12x4xf32>
      %98 = math.absf %97 : vector<12x4xf32>
      %99 = vector.shape_cast %98 : vector<12x4xf32> to vector<1x12x4xf32>
      %cst_28 = arith.constant dense<0.000000e+00> : vector<1xf32>
      %100 = vector.multi_reduction <add>, %99, %cst_28 [1, 2] : vector<1x12x4xf32> to vector<1xf32>
      %101 = vector.shape_cast %100 : vector<1xf32> to vector<1x1x1xf32>
      %102 = vector.extract %101[0, 0, 0] : f32 from vector<1x1x1xf32>
      %103 = vector.extract_strided_slice %53 {offsets = [0, 0], sizes = [12, 1], strides = [1, 1]} : vector<12x4xf32> to vector<12x1xf32>
      %104 = vector.extract_strided_slice %53 {offsets = [0, 1], sizes = [12, 1], strides = [1, 1]} : vector<12x4xf32> to vector<12x1xf32>
      %105 = vector.extract_strided_slice %53 {offsets = [0, 2], sizes = [12, 1], strides = [1, 1]} : vector<12x4xf32> to vector<12x1xf32>
      %106 = vector.extract_strided_slice %53 {offsets = [0, 3], sizes = [12, 1], strides = [1, 1]} : vector<12x4xf32> to vector<12x1xf32>
      %107 = vector.extract_strided_slice %55 {offsets = [0, 0], sizes = [12, 1], strides = [1, 1]} : vector<12x4xf32> to vector<12x1xf32>
      %108 = vector.extract_strided_slice %55 {offsets = [0, 1], sizes = [12, 1], strides = [1, 1]} : vector<12x4xf32> to vector<12x1xf32>
      %109 = vector.extract_strided_slice %55 {offsets = [0, 2], sizes = [12, 1], strides = [1, 1]} : vector<12x4xf32> to vector<12x1xf32>
      %110 = vector.extract_strided_slice %55 {offsets = [0, 3], sizes = [12, 1], strides = [1, 1]} : vector<12x4xf32> to vector<12x1xf32>
      %cst_29 = arith.constant 5.000000e-01 : f32
      %111 = vector.broadcast %cst_29 : f32 to vector<12x1xf32>
      %112 = arith.mulf %111, %105 : vector<12x1xf32>
      %113 = arith.subf %103, %112 : vector<12x1xf32>
      %cst_30 = arith.constant 5.000000e-01 : f32
      %114 = vector.broadcast %cst_30 : f32 to vector<12x1xf32>
      %115 = arith.mulf %114, %106 : vector<12x1xf32>
      %116 = arith.subf %104, %115 : vector<12x1xf32>
      %cst_31 = arith.constant 5.000000e-01 : f32
      %117 = vector.broadcast %cst_31 : f32 to vector<12x1xf32>
      %118 = arith.mulf %117, %105 : vector<12x1xf32>
      %119 = arith.addf %103, %118 : vector<12x1xf32>
      %cst_32 = arith.constant 5.000000e-01 : f32
      %120 = vector.broadcast %cst_32 : f32 to vector<12x1xf32>
      %121 = arith.mulf %120, %106 : vector<12x1xf32>
      %122 = arith.addf %104, %121 : vector<12x1xf32>
      %cst_33 = arith.constant 5.000000e-01 : f32
      %123 = vector.broadcast %cst_33 : f32 to vector<12x1xf32>
      %124 = arith.mulf %123, %109 : vector<12x1xf32>
      %125 = arith.subf %107, %124 : vector<12x1xf32>
      %cst_34 = arith.constant 5.000000e-01 : f32
      %126 = vector.broadcast %cst_34 : f32 to vector<12x1xf32>
      %127 = arith.mulf %126, %110 : vector<12x1xf32>
      %128 = arith.subf %108, %127 : vector<12x1xf32>
      %cst_35 = arith.constant 5.000000e-01 : f32
      %129 = vector.broadcast %cst_35 : f32 to vector<12x1xf32>
      %130 = arith.mulf %129, %109 : vector<12x1xf32>
      %131 = arith.addf %107, %130 : vector<12x1xf32>
      %cst_36 = arith.constant 5.000000e-01 : f32
      %132 = vector.broadcast %cst_36 : f32 to vector<12x1xf32>
      %133 = arith.mulf %132, %110 : vector<12x1xf32>
      %134 = arith.addf %108, %133 : vector<12x1xf32>
      %135 = arith.subf %119, %113 : vector<12x1xf32>
      %136 = arith.subf %122, %116 : vector<12x1xf32>
      %137 = arith.mulf %135, %136 : vector<12x1xf32>
      %138 = arith.subf %131, %125 : vector<12x1xf32>
      %139 = arith.subf %134, %128 : vector<12x1xf32>
      %140 = arith.mulf %138, %139 : vector<12x1xf32>
      %141 = arith.minimumf %119, %131 : vector<12x1xf32>
      %142 = arith.maximumf %113, %125 : vector<12x1xf32>
      %143 = arith.subf %141, %142 : vector<12x1xf32>
      %cst_37 = arith.constant 0.000000e+00 : f32
      %144 = vector.broadcast %cst_37 : f32 to vector<12x1xf32>
      %145 = arith.maximumf %143, %144 : vector<12x1xf32>
      %146 = arith.minimumf %122, %134 : vector<12x1xf32>
      %147 = arith.maximumf %116, %128 : vector<12x1xf32>
      %148 = arith.subf %146, %147 : vector<12x1xf32>
      %cst_38 = arith.constant 0.000000e+00 : f32
      %149 = vector.broadcast %cst_38 : f32 to vector<12x1xf32>
      %150 = arith.maximumf %148, %149 : vector<12x1xf32>
      %151 = arith.mulf %145, %150 : vector<12x1xf32>
      %152 = arith.addf %137, %140 : vector<12x1xf32>
      %153 = arith.subf %152, %151 : vector<12x1xf32>
      %154 = tpu.reciprocal %153 {approx = true} : vector<12x1xf32> -> vector<12x1xf32>
      %155 = arith.mulf %151, %154 : vector<12x1xf32>
      %156 = arith.maximumf %119, %131 : vector<12x1xf32>
      %157 = arith.minimumf %113, %125 : vector<12x1xf32>
      %158 = arith.subf %156, %157 : vector<12x1xf32>
      %159 = arith.maximumf %122, %134 : vector<12x1xf32>
      %160 = arith.minimumf %116, %128 : vector<12x1xf32>
      %161 = arith.subf %159, %160 : vector<12x1xf32>
      %cst_39 = arith.constant 0.000000e+00 : f32
      %162 = vector.broadcast %cst_39 : f32 to vector<12x1xf32>
      %163 = arith.maximumf %158, %162 : vector<12x1xf32>
      %cst_40 = arith.constant 0.000000e+00 : f32
      %164 = vector.broadcast %cst_40 : f32 to vector<12x1xf32>
      %165 = arith.maximumf %161, %164 : vector<12x1xf32>
      %166 = arith.mulf %163, %165 : vector<12x1xf32>
      %167 = arith.subf %166, %153 : vector<12x1xf32>
      %168 = tpu.reciprocal %166 {approx = true} : vector<12x1xf32> -> vector<12x1xf32>
      %169 = arith.mulf %167, %168 : vector<12x1xf32>
      %170 = arith.subf %155, %169 : vector<12x1xf32>
      %cst_41 = arith.constant 1.000000e+00 : f32
      %171 = vector.broadcast %cst_41 : f32 to vector<12x1xf32>
      %172 = arith.subf %171, %170 : vector<12x1xf32>
      %173 = vector.shape_cast %172 : vector<12x1xf32> to vector<1x12x1xf32>
      %cst_42 = arith.constant dense<0.000000e+00> : vector<1xf32>
      %174 = vector.multi_reduction <add>, %173, %cst_42 [1, 2] : vector<1x12x1xf32> to vector<1xf32>
      %175 = vector.shape_cast %174 : vector<1xf32> to vector<1x1x1xf32>
      %176 = vector.extract %175[0, 0, 0] : f32 from vector<1x1x1xf32>
      %c2_i32 = arith.constant 2 : i32
      %177 = vector.broadcast %c2_i32 : i32 to vector<1x128xi32>
      %178 = arith.cmpi eq, %33, %177 : vector<1x128xi32>
      %cst_43 = arith.constant 0.000000e+00 : f32
      %179 = vector.broadcast %83 : f32 to vector<1x128xf32>
      %180 = vector.broadcast %cst_43 : f32 to vector<1x128xf32>
      %181 = arith.select %178, %179, %180 : vector<1x128xi1>, vector<1x128xf32>
      %c3_i32 = arith.constant 3 : i32
      %182 = vector.broadcast %c3_i32 : i32 to vector<1x128xi32>
      %183 = arith.cmpi eq, %33, %182 : vector<1x128xi32>
      %cst_44 = arith.constant 0.000000e+00 : f32
      %184 = vector.broadcast %87 : f32 to vector<1x128xf32>
      %185 = vector.broadcast %cst_44 : f32 to vector<1x128xf32>
      %186 = arith.select %183, %184, %185 : vector<1x128xi1>, vector<1x128xf32>
      %187 = arith.addf %181, %186 : vector<1x128xf32>
      %c4_i32 = arith.constant 4 : i32
      %188 = vector.broadcast %c4_i32 : i32 to vector<1x128xi32>
      %189 = arith.cmpi eq, %33, %188 : vector<1x128xi32>
      %cst_45 = arith.constant 0.000000e+00 : f32
      %190 = vector.broadcast %91 : f32 to vector<1x128xf32>
      %191 = vector.broadcast %cst_45 : f32 to vector<1x128xf32>
      %192 = arith.select %189, %190, %191 : vector<1x128xi1>, vector<1x128xf32>
      %193 = arith.addf %187, %192 : vector<1x128xf32>
      %c5_i32 = arith.constant 5 : i32
      %194 = vector.broadcast %c5_i32 : i32 to vector<1x128xi32>
      %195 = arith.cmpi eq, %33, %194 : vector<1x128xi32>
      %cst_46 = arith.constant 0.000000e+00 : f32
      %196 = vector.broadcast %96 : f32 to vector<1x128xf32>
      %197 = vector.broadcast %cst_46 : f32 to vector<1x128xf32>
      %198 = arith.select %195, %196, %197 : vector<1x128xi1>, vector<1x128xf32>
      %199 = arith.addf %193, %198 : vector<1x128xf32>
      %c6_i32 = arith.constant 6 : i32
      %200 = vector.broadcast %c6_i32 : i32 to vector<1x128xi32>
      %201 = arith.cmpi eq, %33, %200 : vector<1x128xi32>
      %cst_47 = arith.constant 0.000000e+00 : f32
      %202 = vector.broadcast %102 : f32 to vector<1x128xf32>
      %203 = vector.broadcast %cst_47 : f32 to vector<1x128xf32>
      %204 = arith.select %201, %202, %203 : vector<1x128xi1>, vector<1x128xf32>
      %205 = arith.addf %199, %204 : vector<1x128xf32>
      %c7_i32 = arith.constant 7 : i32
      %206 = vector.broadcast %c7_i32 : i32 to vector<1x128xi32>
      %207 = arith.cmpi eq, %33, %206 : vector<1x128xi32>
      %cst_48 = arith.constant 0.000000e+00 : f32
      %208 = vector.broadcast %176 : f32 to vector<1x128xf32>
      %209 = vector.broadcast %cst_48 : f32 to vector<1x128xf32>
      %210 = arith.select %207, %208, %209 : vector<1x128xi1>, vector<1x128xf32>
      %211 = arith.addf %205, %210 : vector<1x128xf32>
      %212 = arith.addf %44, %211 : vector<1x128xf32>
      %c0_49 = arith.constant 0 : index
      %c0_50 = arith.constant 0 : index
      %213 = vector.load %arg6[%c0_49, %c0_50] : memref<1x128xf32, #tpu.memory_space<vmem>>, vector<1x128xf32>
      tpu.vector_store %arg6[%c0_49, %c0_50], %212 {strides = array<i32>} : memref<1x128xf32, #tpu.memory_space<vmem>>, vector<1x128xf32>,
    } else {
    }
    return
  }
  func.func @transform_0(%arg0: i32) -> (i32, i32) {
    %c0_i32 = arith.constant 0 : i32
    %c0_i32_0 = arith.constant 0 : i32
    return %arg0, %c0_i32 : i32, i32
  }
  func.func @transform_1(%arg0: i32) -> (i32, i32) {
    %c0_i32 = arith.constant 0 : i32
    %c0_i32_0 = arith.constant 0 : i32
    %c0_i32_1 = arith.constant 0 : i32
    return %c0_i32, %c0_i32_0 : i32, i32
  }
  func.func @transform_2(%arg0: i32) -> (i32, i32) {
    %c0_i32 = arith.constant 0 : i32
    %c0_i32_0 = arith.constant 0 : i32
    %c0_i32_1 = arith.constant 0 : i32
    return %c0_i32, %c0_i32_0 : i32, i32
  }
  func.func @transform_3(%arg0: i32) -> (i32, i32) {
    %c0_i32 = arith.constant 0 : i32
    %c0_i32_0 = arith.constant 0 : i32
    %c0_i32_1 = arith.constant 0 : i32
    return %c0_i32, %c0_i32_0 : i32, i32
  }
  func.func @transform_4(%arg0: i32) -> (i32, i32) {
    %c0_i32 = arith.constant 0 : i32
    %c0_i32_0 = arith.constant 0 : i32
    %c0_i32_1 = arith.constant 0 : i32
    return %c0_i32, %c0_i32_0 : i32, i32
  }
  func.func @transform_5(%arg0: i32) -> (i32, i32) {
    %c0_i32 = arith.constant 0 : i32
    %c0_i32_0 = arith.constant 0 : i32
    return %arg0, %c0_i32 : i32, i32
  }
}

</mosaic_0001>

<llo_original>
// kernel: tpu_custom_call.1
$region0: #{tpu_custom_call.1}
  #allocation0 [shape = 'u32[]', space=smem, size = 0x4, offset = 0x4, fixed_abs, tag = 'smem constant byte address 0x4 - core index']
  #allocation1 [shape = 'u32[144,128]{1,0:T(1,128)}', space=vmem, size = 0x12000, scoped, tag = 'internal scratch']
  %s0 = inlined_call_operand.vmem [shape: f32[16,5], index: 0, kind: input, shape index: {}]
  %s1 = inlined_call_operand.vmem [shape: f32[12,9], index: 1, kind: input, shape index: {}]
  %s2 = inlined_call_operand.vmem [shape: s32[12,1], index: 2, kind: input, shape index: {}]
  %s3 = inlined_call_operand.vmem [shape: f32[12,4], index: 3, kind: input, shape index: {}]
  %s4 = inlined_call_operand.vmem [shape: f32[1,5], index: 4, kind: input, shape index: {}]
  %s5 = inlined_call_operand.hbm [shape: f32[1,128], index: 5, kind: output, shape index: {}]
  %s6 = sld [smem:[#allocation0]]
  $region38: #{tpu_custom_call.1} parent=0
    _
  %s8 = ssub.s32 1, %s6
  %s9 = scalar_select 0, %s8, %s6
  $region1: #{tpu_custom_call.1} parent=0
    #allocation2 [shape = 'u8[512]{0}', space=vmem, size = 0x400, scoped, tag = 'output window, operand 0, single buffered']
    #allocation3 [shape = 's32[1]{0}', space=sflag, size = 0x4, scoped, tag = 'scoped memory for tpu_custom_call.1']
    %10 = vsyncpa [#allocation3], 0
    // Predicated region
    $region2: #{tpu_custom_call.1} parent=1 // pred_check
      _
    $region3: #{tpu_custom_call.1} parent=1 // pred_check_branch
      %12 = sbr.rel (0) target = $region5
    $region4: #{tpu_custom_call.1} parent=1 // pred_region
      _
    $region5: #{tpu_custom_call.1} parent=1 // pred_fallthru
      _
    // Predicated region
    $region6: #{tpu_custom_call.1} parent=1 // pred_check
      _
    $region7: #{tpu_custom_call.1} parent=1 // pred_check_branch
      %14 = sbr.rel (0) target = $region9
    $region8: #{tpu_custom_call.1} parent=1 // pred_region
      _
    $region9: #{tpu_custom_call.1} parent=1 // pred_fallthru
      _
    // Predicated region
    $region10: #{tpu_custom_call.1} parent=1 // pred_check
      _
    $region11: #{tpu_custom_call.1} parent=1 // pred_check_branch
      %16 = sbr.rel (0) target = $region13
    $region12: #{tpu_custom_call.1} parent=1 // pred_region
      _
    $region13: #{tpu_custom_call.1} parent=1 // pred_fallthru
      _
    // Predicated region
    $region14: #{tpu_custom_call.1} parent=1 // pred_check
      _
    $region15: #{tpu_custom_call.1} parent=1 // pred_check_branch
      %18 = sbr.rel (0) target = $region17
    $region16: #{tpu_custom_call.1} parent=1 // pred_region
      _
    $region17: #{tpu_custom_call.1} parent=1 // pred_fallthru
      _
    // Predicated region
    $region18: #{tpu_custom_call.1} parent=1 // pred_check
      _
    $region19: #{tpu_custom_call.1} parent=1 // pred_check_branch
      %20 = sbr.rel (0) target = $region21
    $region20: #{tpu_custom_call.1} parent=1 // pred_region
      _
    $region21: #{tpu_custom_call.1} parent=1 // pred_fallthru
      _
    %v21 = vld [vmem:[%s0] sm:$0xff]
    %v22 = vld [vmem:[%s0 + $0x8] sm:$0xff]
    %s23 = smul.u32 0, 16
    %v24 = vlaneseq
    %v25 = vshrl.u32 %v24, 7
    %v26 = vadd.s32 %v25, 8
    %v27 = vstv %s23
    %v28 = vadd.s32 %v27, %v25
    %v29 = vadd.s32 %v27, %v26
    %vm30 = vcmp.lt.s32.totalorder %v28, 16
    %vm31 = vcmp.lt.s32.totalorder %v29, 16
    %v32 = vsel %vm30, 1, 0
    %v33 = vsel %vm31, 1, 0
    %v34 = vcvt.s32.f32 %v32
    %v35 = vcvt.s32.f32 %v33
    %vm36 = vcmp.eq.s32.totalorder %v32, 1
    %vm37 = vcmp.eq.s32.totalorder %v33, 1
    %v38 = vsel %vm36, %v21, 0.0
    %v39 = vsel %vm37, %v22, 0.0
    %vm40 = vcmask 39936
    %v41 = vsel %vm40, %v38, -inf
    %42 = vmax.xlane.f32.xlu0 %v41
    %v43 = vpop.xlane.xlu0 %42
    %v44 = vsel %vm40, %v39, -inf
    %45 = vmax.xlane.f32.xlu0 %v44
    %v46 = vpop.xlane.xlu0 %45
    %v47 = vsub.f32 %v38, %v43
    %v48 = vsub.f32 %v39, %v46
    %v49 = vmul.f32 %v47, 1.442695
    %v50 = vpow.pop %v49
    %v51 = vmul.f32 %v48, 1.442695
    %v52 = vpow.pop %v51
    %v53 = vsel %vm40, %v50, 0.0
    %54 = vadd.xlane.f32.xlu0 %v53
    %v55 = vpop.xlane.xlu0 %54
    %v56 = vsel %vm40, %v52, 0.0
    %57 = vadd.xlane.f32.xlu0 %v56
    %v58 = vpop.xlane.xlu0 %57
    %v59 = vlog2.pop %v55
    %v60 = vmul.f32 %v59, 0.6931472
    %v61 = vlog2.pop %v58
    %v62 = vmul.f32 %v61, 0.6931472
    %v63 = vadd.f32 %v43, %v60
    %v64 = vadd.f32 %v46, %v62
    %v65 = vmul.f32 %v63, %v34
    %v66 = vmul.f32 %v64, %v35
    %vm67 = vcmask 7168
    %v68 = vsel %vm67, %v65, 0.0
    %v69 = vsel %vm67, %v66, 0.0
    %v70 = vadd.f32 %v68, %v69
    %71 = vadd.xlane.f32.xlu0 %v70
    %v72 = vpop.xlane.xlu0 %71
    %v73 = vrot.slane %v72, 4
    %v74 = vadd.f32 %v72, %v73
    %v75 = vrot.slane %v74, 2
    %v76 = vadd.f32 %v74, %v75
    %v77 = vrot.slane %v76, 1
    %v78 = vadd.f32 %v76, %v77
    %s79 = vtos %v78
    %v80 = vmul.f32 %v38, %v34
    %v81 = vmul.f32 %v39, %v35
    %84 = vrot.lane.b32.xlu0 %v80, 124
    %v85 = vpop.permute.xlu0 %84
    %86 = vrot.lane.b32.xlu0 %v81, 124
    %v87 = vpop.permute.xlu0 %86
    %v90 = vsel %vm67, %v85, 0.0
    %v91 = vsel %vm67, %v87, 0.0
    %v92 = vadd.f32 %v90, %v91
    %93 = vadd.xlane.f32.xlu0 %v92
    %v94 = vpop.xlane.xlu0 %93
    %v95 = vrot.slane %v94, 4
    %v96 = vadd.f32 %v94, %v95
    %v97 = vrot.slane %v96, 2
    %v98 = vadd.f32 %v96, %v97
    %v99 = vrot.slane %v98, 1
    %v100 = vadd.f32 %v98, %v99
    %s101 = vtos %v100
    %v102 = vlaneseq
    %v103 = vand.u32 %v102, 127
    %vm104 = vcmp.eq.s32.totalorder %v103, 0
    %v105 = vstv %s79
    %v106 = vsel %vm104, %v105, 0.0
    %vm107 = vcmp.eq.s32.totalorder %v103, 1
    %v108 = vstv %s101
    %v109 = vsel %vm107, %v108, 0.0
    %v110 = vadd.f32 %v106, %v109
    %p111 = scmp.gt.s32.totalorder 0, 0
    // Predicated region
    $region22: #{tpu_custom_call.1} parent=1 // pred_check
      %p112 = pneg %p111
    $region23: #{tpu_custom_call.1} parent=1 // pred_check_branch
      %114 = sbr.rel (%p112) target = $region25
    $region24: #{tpu_custom_call.1} parent=1 // pred_region
      %115 = vst [vmem:[#allocation2] sm:$0x1] %v110
    $region25: #{tpu_custom_call.1} parent=1 // pred_fallthru
      _
    %p116 = scmp.eq.s32.totalorder 0, 0
    // Predicated region
    $region26: #{tpu_custom_call.1} parent=1 // pred_check
      %p117 = pneg %p116
    $region27: #{tpu_custom_call.1} parent=1 // pred_check_branch
      %119 = sbr.rel (%p117) target = $region29
    $region28: #{tpu_custom_call.1} parent=1 // pred_region
      %v120 = vld [vmem:[%s1] sm:$0xff]
      %v121 = vld [vmem:[%s1 + $0x8] sm:$0xf]
      %v122 = vld [vmem:[%s2] sm:$0xff]
      %v123 = vld [vmem:[%s2 + $0x8] sm:$0xf]
      %v124 = vld [vmem:[%s3] sm:$0xff]
      %v125 = vld [vmem:[%s3 + $0x8] sm:$0xf]
      %v126 = vld [vmem:[%s4] sm:$0x1]
      %v127 = vsel %vm40, %v120, -inf
      %128 = vmax.xlane.f32.xlu0 %v127
      %v129 = vpop.xlane.xlu0 %128
      %vm130 = vcmask 35840
      %v131 = vsel %vm130, %v121, -inf
      %132 = vmax.xlane.f32.xlu0 %v131
      %v133 = vpop.xlane.xlu0 %132
      %v134 = vsub.f32 %v120, %v129
      %v135 = vsub.f32 %v121, %v133
      %v136 = vmul.f32 %v134, 1.442695
      %v137 = vpow.pop %v136
      %v138 = vmul.f32 %v135, 1.442695
      %v139 = vpow.pop %v138
      %v140 = vsel %vm40, %v137, 0.0
      %141 = vadd.xlane.f32.xlu0 %v140
      %v142 = vpop.xlane.xlu0 %141
      %v143 = vsel %vm130, %v139, 0.0
      %144 = vadd.xlane.f32.xlu0 %v143
      %v145 = vpop.xlane.xlu0 %144
      %v146 = vlog2.pop %v142
      %v147 = vmul.f32 %v146, 0.6931472
      %v148 = vlog2.pop %v145
      %v149 = vmul.f32 %v148, 0.6931472
      %v150 = vadd.f32 %v129, %v147
      %v151 = vadd.f32 %v133, %v149
      %152 = vset.pattern.permute.xlu0 0
      %153 = vperm.xlu0 %152, %v122
      %v154 = vpop.permute.xlu0 %153
      %155 = vset.pattern.permute.xlu0 0
      %156 = vperm.xlu0 %155, %v123
      %v157 = vpop.permute.xlu0 %156
      %vm158 = vcmp.eq.s32.totalorder %v103, %v154
      %vm159 = vcmp.eq.s32.totalorder %v103, %v157
      %v160 = vsel %vm158, 1, 0
      %v161 = vsel %vm159, 1, 0
      %v162 = vcvt.s32.f32 %v160
      %v163 = vcvt.s32.f32 %v161
      %v164 = vmul.f32 %v120, %v162
      %v165 = vmul.f32 %v121, %v163
      %v166 = vsel %vm40, %v164, 0.0
      %167 = vadd.xlane.f32.xlu0 %v166
      %v168 = vpop.xlane.xlu0 %167
      %v169 = vsel %vm130, %v165, 0.0
      %170 = vadd.xlane.f32.xlu0 %v169
      %v171 = vpop.xlane.xlu0 %170
      %v173 = vlaneseq
      %v174 = vshrl.u32 %v173, 7
      %v175 = vsub.s32 0, %v174
      %v176 = vrot.slane %v126, %v175
      %v178 = vmul.f32 %v176, %v162
      %v179 = vmul.f32 %v176, %v163
      %v180 = vsel %vm40, %v178, 0.0
      %181 = vadd.xlane.f32.xlu0 %v180
      %v182 = vpop.xlane.xlu0 %181
      %v183 = vsel %vm130, %v179, 0.0
      %184 = vadd.xlane.f32.xlu0 %v183
      %v185 = vpop.xlane.xlu0 %184
      %v186 = vsub.f32 %v150, %v168
      %v187 = vsub.f32 %v151, %v171
      %v188 = vmul.f32 %v182, %v186
      %v189 = vmul.f32 %v185, %v187
      %v190 = vsel %vm67, %v188, 0.0
      %vm191 = vcmask 3072
      %v192 = vsel %vm191, %v189, 0.0
      %v193 = vadd.f32 %v190, %v192
      %194 = vadd.xlane.f32.xlu0 %v193
      %v195 = vpop.xlane.xlu0 %194
      %v196 = vrot.slane %v195, 4
      %v197 = vadd.f32 %v195, %v196
      %v198 = vrot.slane %v197, 2
      %v199 = vadd.f32 %v197, %v198
      %v200 = vrot.slane %v199, 1
      %v201 = vadd.f32 %v199, %v200
      %s202 = vtos %v201
      %v203 = vsel %vm67, %v182, 0.0
      %v204 = vsel %vm191, %v185, 0.0
      %v205 = vadd.f32 %v203, %v204
      %206 = vadd.xlane.f32.xlu0 %v205
      %v207 = vpop.xlane.xlu0 %206
      %v208 = vrot.slane %v207, 4
      %v209 = vadd.f32 %v207, %v208
      %v210 = vrot.slane %v209, 2
      %v211 = vadd.f32 %v209, %v210
      %v212 = vrot.slane %v211, 1
      %v213 = vadd.f32 %v211, %v212
      %s214 = vtos %v213
      %v215 = vsel %vm67, %v150, 0.0
      %v216 = vsel %vm191, %v151, 0.0
      %v217 = vadd.f32 %v215, %v216
      %218 = vadd.xlane.f32.xlu0 %v217
      %v219 = vpop.xlane.xlu0 %218
      %v220 = vrot.slane %v219, 4
      %v221 = vadd.f32 %v219, %v220
      %v222 = vrot.slane %v221, 2
      %v223 = vadd.f32 %v221, %v222
      %v224 = vrot.slane %v223, 1
      %v225 = vadd.f32 %v223, %v224
      %s226 = vtos %v225
      %229 = vrot.lane.b32.xlu0 %v120, 124
      %v230 = vpop.permute.xlu0 %229
      %231 = vrot.lane.b32.xlu0 %v121, 124
      %v232 = vpop.permute.xlu0 %231
      %v235 = vsel %vm67, %v230, 0.0
      %v236 = vsel %vm191, %v232, 0.0
      %v237 = vadd.f32 %v235, %v236
      %238 = vadd.xlane.f32.xlu0 %v237
      %v239 = vpop.xlane.xlu0 %238
      %v240 = vrot.slane %v239, 4
      %v241 = vadd.f32 %v239, %v240
      %v242 = vrot.slane %v241, 2
      %v243 = vadd.f32 %v241, %v242
      %v244 = vrot.slane %v243, 1
      %v245 = vadd.f32 %v243, %v244
      %s246 = vtos %v245
      %249 = vrot.lane.b32.xlu0 %v124, 5
      %v250 = vpop.permute.xlu0 %249
      %251 = vrot.lane.b32.xlu0 %v125, 5
      %v252 = vpop.permute.xlu0 %251
      %v255 = vsub.f32 %v120, %v250
      %v256 = vsub.f32 %v121, %v252
      %v257 = vand.u32 2147483647, %v255
      %v258 = vand.u32 2147483647, %v256
      %261 = vrot.lane.b32.xlu0 %v257, 123
      %v262 = vpop.permute.xlu0 %261
      %263 = vrot.lane.b32.xlu0 %v258, 123
      %v264 = vpop.permute.xlu0 %263
      %vm267 = vcmask 31744
      %v268 = vsel %vm267, %v262, 0.0
      %vm269 = vcmask 27648
      %v270 = vsel %vm269, %v264, 0.0
      %v271 = vadd.f32 %v268, %v270
      %272 = vadd.xlane.f32.xlu0 %v271
      %v273 = vpop.xlane.xlu0 %272
      %v274 = vrot.slane %v273, 4
      %v275 = vadd.f32 %v273, %v274
      %v276 = vrot.slane %v275, 2
      %v277 = vadd.f32 %v275, %v276
      %v278 = vrot.slane %v277, 1
      %v279 = vadd.f32 %v277, %v278
      %s280 = vtos %v279
      %v281 = vmul.f32 %v120, 0.5
      %v282 = vmul.f32 %v121, 0.5
      %285 = vrot.lane.b32.xlu0 %v281, 126
      %v286 = vpop.permute.xlu0 %285
      %287 = vrot.lane.b32.xlu0 %v282, 126
      %v288 = vpop.permute.xlu0 %287
      %v291 = vsub.f32 %v120, %v286
      %v292 = vsub.f32 %v121, %v288
      %v293 = vadd.f32 %v120, %v286
      %v294 = vadd.f32 %v121, %v288
      %v295 = vmul.f32 %v124, 0.5
      %v296 = vmul.f32 %v125, 0.5
      %299 = vrot.lane.b32.xlu0 %v295, 126
      %v300 = vpop.permute.xlu0 %299
      %301 = vrot.lane.b32.xlu0 %v296, 126
      %v302 = vpop.permute.xlu0 %301
      %v305 = vsub.f32 %v124, %v300
      %v306 = vsub.f32 %v125, %v302
      %v307 = vadd.f32 %v124, %v300
      %v308 = vadd.f32 %v125, %v302
      %v309 = vsub.f32 %v293, %v291
      %v310 = vsub.f32 %v294, %v292
      %313 = vrot.lane.b32.xlu0 %v309, 127
      %v314 = vpop.permute.xlu0 %313
      %315 = vrot.lane.b32.xlu0 %v310, 127
      %v316 = vpop.permute.xlu0 %315
      %v319 = vmul.f32 %v309, %v314
      %v320 = vmul.f32 %v310, %v316
      %v321 = vsub.f32 %v307, %v305
      %v322 = vsub.f32 %v308, %v306
      %325 = vrot.lane.b32.xlu0 %v321, 127
      %v326 = vpop.permute.xlu0 %325
      %327 = vrot.lane.b32.xlu0 %v322, 127
      %v328 = vpop.permute.xlu0 %327
      %v331 = vmul.f32 %v321, %v326
      %v332 = vmul.f32 %v322, %v328
      %335 = vrot.lane.b32.xlu0 %v307, 5
      %v336 = vpop.permute.xlu0 %335
      %337 = vrot.lane.b32.xlu0 %v308, 5
      %v338 = vpop.permute.xlu0 %337
      %v341 = vmin.f32 %v293, %v336
      %v342 = vmin.f32 %v294, %v338
      %345 = vrot.lane.b32.xlu0 %v305, 5
      %v346 = vpop.permute.xlu0 %345
      %347 = vrot.lane.b32.xlu0 %v306, 5
      %v348 = vpop.permute.xlu0 %347
      %v351 = vmax.f32 %v291, %v346
      %v352 = vmax.f32 %v292, %v348
      %v353 = vsub.f32 %v341, %v351
      %v354 = vsub.f32 %v342, %v352
      %v355 = vmax.f32 %v353, 0.0
      %v356 = vmax.f32 %v354, 0.0
      %359 = vrot.lane.b32.xlu0 %v355, 127
      %v360 = vpop.permute.xlu0 %359
      %361 = vrot.lane.b32.xlu0 %v356, 127
      %v362 = vpop.permute.xlu0 %361
      %v365 = vmul.f32 %v355, %v360
      %v366 = vmul.f32 %v356, %v362
      %369 = vrot.lane.b32.xlu0 %v331, 5
      %v370 = vpop.permute.xlu0 %369
      %371 = vrot.lane.b32.xlu0 %v332, 5
      %v372 = vpop.permute.xlu0 %371
      %v375 = vadd.f32 %v319, %v370
      %v376 = vadd.f32 %v320, %v372
      %v377 = vsub.f32 %v375, %v365
      %v378 = vsub.f32 %v376, %v366
      %v379 = vrcp.pop %v377
      %v380 = vrcp.pop %v378
      %v381 = vmul.f32 %v365, %v379
      %v382 = vmul.f32 %v366, %v380
      %v383 = vmax.f32 %v293, %v336
      %v384 = vmax.f32 %v294, %v338
      %v385 = vmin.f32 %v291, %v346
      %v386 = vmin.f32 %v292, %v348
      %v387 = vsub.f32 %v383, %v385
      %v388 = vsub.f32 %v384, %v386
      %v389 = vmax.f32 %v387, 0.0
      %v390 = vmax.f32 %v388, 0.0
      %393 = vrot.lane.b32.xlu0 %v389, 127
      %v394 = vpop.permute.xlu0 %393
      %395 = vrot.lane.b32.xlu0 %v390, 127
      %v396 = vpop.permute.xlu0 %395
      %v399 = vmul.f32 %v389, %v394
      %v400 = vmul.f32 %v390, %v396
      %v401 = vsub.f32 %v399, %v377
      %v402 = vsub.f32 %v400, %v378
      %v403 = vrcp.pop %v399
      %v404 = vrcp.pop %v400
      %v405 = vmul.f32 %v401, %v403
      %v406 = vmul.f32 %v402, %v404
      %v407 = vsub.f32 %v381, %v405
      %v408 = vsub.f32 %v382, %v406
      %v409 = vsub.f32 1.0, %v407
      %v410 = vsub.f32 1.0, %v408
      %413 = vrot.lane.b32.xlu0 %v409, 123
      %v414 = vpop.permute.xlu0 %413
      %415 = vrot.lane.b32.xlu0 %v410, 123
      %v416 = vpop.permute.xlu0 %415
      %v419 = vsel %vm67, %v414, 0.0
      %v420 = vsel %vm191, %v416, 0.0
      %v421 = vadd.f32 %v419, %v420
      %422 = vadd.xlane.f32.xlu0 %v421
      %v423 = vpop.xlane.xlu0 %422
      %v424 = vrot.slane %v423, 4
      %v425 = vadd.f32 %v423, %v424
      %v426 = vrot.slane %v425, 2
      %v427 = vadd.f32 %v425, %v426
      %v428 = vrot.slane %v427, 1
      %v429 = vadd.f32 %v427, %v428
      %s430 = vtos %v429
      %vm431 = vcmp.eq.s32.totalorder %v103, 2
      %v432 = vstv %s202
      %v433 = vsel %vm431, %v432, 0.0
      %vm434 = vcmp.eq.s32.totalorder %v103, 3
      %v435 = vstv %s214
      %v436 = vsel %vm434, %v435, 0.0
      %v437 = vadd.f32 %v433, %v436
      %vm438 = vcmp.eq.s32.totalorder %v103, 4
      %v439 = vstv %s226
      %v440 = vsel %vm438, %v439, 0.0
      %v441 = vadd.f32 %v437, %v440
      %vm442 = vcmp.eq.s32.totalorder %v103, 5
      %v443 = vstv %s246
      %v444 = vsel %vm442, %v443, 0.0
      %v445 = vadd.f32 %v441, %v444
      %vm446 = vcmp.eq.s32.totalorder %v103, 6
      %v447 = vstv %s280
      %v448 = vsel %vm446, %v447, 0.0
      %v449 = vadd.f32 %v445, %v448
      %vm450 = vcmp.eq.s32.totalorder %v103, 7
      %v451 = vstv %s430
      %v452 = vsel %vm450, %v451, 0.0
      %v453 = vadd.f32 %v449, %v452
      %v454 = vadd.f32 %v110, %v453
      %455 = vst [vmem:[#allocation2] sm:$0x1] %v454
    $region29: #{tpu_custom_call.1} parent=1 // pred_fallthru
      _
    // Predicated region
    $region30: #{tpu_custom_call.1} parent=1 // pred_check
      _
    $region31: #{tpu_custom_call.1} parent=1 // pred_check_branch
      %457 = sbr.rel (0) target = $region33
    $region32: #{tpu_custom_call.1} parent=1 // pred_region
      %s459 = ssub.s32 16, 16
      %460 = vsyncadd [#allocation3], %s459
      %s462 = sshll.u32 [#allocation2], 4
      %s463 = int_to_ptr.vmem [resolvable:$true] %s462
      %465 = dma.vmem_to_hbm [thread:$0]  %s463, 16, %s5, [#allocation3]
    $region33: #{tpu_custom_call.1} parent=1 // pred_fallthru
      _
    // Predicated region
    $region34: #{tpu_custom_call.1} parent=1 // pred_check
      _
    $region35: #{tpu_custom_call.1} parent=1 // pred_check_branch
      %467 = sbr.rel (0) target = $region37
    $region36: #{tpu_custom_call.1} parent=1 // pred_region
      %468 = dma.done [#allocation3], 16
    $region37: #{tpu_custom_call.1} parent=1 // pred_fallthru
      _
    %469 = vsyncpa [#allocation3], 1

</llo_original>
